<compile_context>
chip_gen: v5e
topology: v5e:2x2
jax: 0.10.0
libtpu: 0.0.40
codegen_flags: <defaults>
</compile_context>

<pallas_src>
import jax
import jax.numpy as jnp
from jax.experimental import pallas as pl
from jax.experimental.pallas import tpu as pltpu


def _round_up(n, m):
    return ((n + m - 1) // m) * m


def _fused_rope_sum_kernel(x_ref, wsumT_ref, wtab_ref, out_ref):
    # (TILE_M, hidden) @ (hidden, hidden) on the MXU, f32 accumulation.
    s = jnp.dot(x_ref[...], wsumT_ref[...], preferred_element_type=jnp.float32)
    # Folded-RoPE elementwise weight (already includes rotate_half folding and
    # head tiling), then reduce this tile to a single scalar partial sum.
    prod = s * wtab_ref[...]
    partial = jnp.sum(jnp.sum(prod, axis=1, keepdims=True),
                      axis=0, keepdims=True)                 # (1, 1)
    # Lane-dense full-block store (no masked vst); wrapper reads [tile, 0, 0].
    out_ref[...] = jnp.broadcast_to(partial[None, :, :], out_ref.shape)


def rope_sum(x, wq, wk, cos, sin, position_ids, head_num):
    """Equivalent of Model.forward(x, cos, sin, position_ids) -> scalar."""
    bsz, seq, hidden = x.shape
    D = hidden // head_num
    f32 = jnp.float32

    # ---- wrapper-side algebraic prework (tiny tables, pure glue) ----
    # Fuse the two projections: output is linear in q + k.
    wsum_T = (wq.astype(f32) + wk.astype(f32)).T             # (hidden_in, hidden_out)

    # Fold rotate_half into the table:  cos + cat(sin[D/2:], -sin[:D/2]).
    cos_sel = cos[position_ids].astype(f32)                  # (seq, D)
    sin_sel = sin[position_ids].astype(f32)                  # (seq, D)
    sin_rot = jnp.concatenate([sin_sel[:, D // 2:], -sin_sel[:, :D // 2]], axis=-1)
    w_head = cos_sel + sin_rot                               # (seq, D)
    w_full = jnp.tile(w_head, (1, head_num))                 # (seq, hidden)

    # Flatten batch*seq into one matmul M dimension; table repeats over batch.
    M = bsz * seq
    x_flat = x.astype(f32).reshape(M, hidden)                # (M, hidden)
    w_big = jnp.tile(w_full, (bsz, 1))                       # (M, hidden)

    # Tile M (multiples of 8 sublanes, up to 512 rows/tile); zero-pad ragged
    # rows — zero rows contribute exactly 0 to the sum.
    TILE_M = min(512, _round_up(M, 8))
    M_pad = _round_up(M, TILE_M)
    if M_pad != M:
        pad = M_pad - M
        x_flat = jnp.pad(x_flat, ((0, pad), (0, 0)))
        w_big = jnp.pad(w_big, ((0, pad), (0, 0)))
    num_tiles = M_pad // TILE_M

    out = pl.pallas_call(
        _fused_rope_sum_kernel,
        out_shape=jax.ShapeDtypeStruct((num_tiles, 8, 128), jnp.float32),
        grid_spec=pltpu.PrefetchScalarGridSpec(
            num_scalar_prefetch=0,
            grid=(num_tiles,),
            in_specs=[
                pl.BlockSpec((TILE_M, hidden), lambda i: (i, 0)),   # x tile
                pl.BlockSpec((hidden, hidden), lambda i: (0, 0)),   # fused weight
                pl.BlockSpec((TILE_M, hidden), lambda i: (i, 0)),   # folded table
            ],
            out_specs=pl.BlockSpec((1, 8, 128), lambda i: (i, 0, 0)),
        ),
        compiler_params=pltpu.CompilerParams(
            dimension_semantics=("parallel",)),     # independent tiles (2 TCs on v7x)
    )(x_flat, wsum_T, w_big)

    # Tiny final reduction over per-tile partials (wrapper-side glue).
    return jnp.sum(out[:, 0, 0])


def _reference(x, wq, wk, cos, sin, position_ids, head_num):
    """Pure-JAX replica of the PyTorch forward for validation."""
    bsz, seq, hidden = x.shape
    D = hidden // head_num
    q = x @ wq.T
    k = x @ wk.T
    q = q.reshape(bsz, seq, head_num, D).transpose(0, 2, 1, 3)
    k = k.reshape(bsz, seq, head_num, D).transpose(0, 2, 1, 3)
    c = cos[position_ids][None, :, :]     # unsqueeze(0) -> broadcast over (bsz, H)
    s = sin[position_ids][None, :, :]

    def rot(v):
        return jnp.concatenate([-v[..., D // 2:], v[..., :D // 2]], axis=-1)

    q_e = q * c + rot(q) * s
    k_e = k * c + rot(k) * s
    return jnp.sum(q_e + k_e)


if __name__ == "__main__":
    # Small shapes consistent with the module.
    bsz, seq_len = 2, 8
    head_num, hidden_dim = 4, 32
    head_dim = hidden_dim // head_num
    max_pos = 16

    key = jax.random.PRNGKey(0)
    kx, kq, kk = jax.random.split(key, 3)

    x = jax.random.normal(kx, (bsz, seq_len, hidden_dim), dtype=jnp.float32)

    # Deterministic Linear weights (torch Linear: weight shape (out, in)).
    bound = 1.0 / jnp.sqrt(hidden_dim)
    wq = jax.random.uniform(kq, (hidden_dim, hidden_dim),
                            minval=-bound, maxval=bound, dtype=jnp.float32)
    wk = jax.random.uniform(kk, (hidden_dim, hidden_dim),
                            minval=-bound, maxval=bound, dtype=jnp.float32)

    # Standard RoPE cos/sin tables: (max_pos, head_dim).
    inv_freq = 1.0 / (10000.0 ** (jnp.arange(0, head_dim, 2, dtype=jnp.float32)
                                  / head_dim))
    pos = jnp.arange(max_pos, dtype=jnp.float32)
    freqs = pos[:, None] * inv_freq[None, :]
    emb = jnp.concatenate([freqs, freqs], axis=-1)
    cos = jnp.cos(emb)
    sin = jnp.sin(emb)

    position_ids = jnp.arange(seq_len, dtype=jnp.int32)

    out = rope_sum(x, wq, wk, cos, sin, position_ids, head_num)
    out = jax.block_until_ready(out)

    ref = _reference(x, wq, wk, cos, sin, position_ids, head_num)
    assert jnp.allclose(out, ref, rtol=1e-4, atol=1e-3), (out, ref)

    print("KERNEL_OK")
</pallas_src>

<mosaic_0001>
module attributes {stable_mosaic.version = 11 : i64} {
  func.func @_fused_rope_sum_kernel(%arg0: i32, %arg1: memref<16x32xf32, #tpu.memory_space<vmem>>, %arg2: memref<32x32xf32, #tpu.memory_space<vmem>>, %arg3: memref<16x32xf32, #tpu.memory_space<vmem>>, %arg4: memref<1x8x128xf32, #tpu.memory_space<vmem>>) attributes {dimension_semantics = [#tpu.dimension_semantics<parallel>], iteration_bounds = array<i64: 1>, scalar_prefetch = 0 : i64, scratch_operands = 0 : i64, tpu.core_type = #tpu.core_type<tc>, window_params = [{transform_indices = @transform_0, window_bounds = array<i64: 16, 32>}, {pipeline_mode = #tpu.pipeline_mode<synchronous>, transform_indices = @transform_1, window_bounds = array<i64: 32, 32>}, {transform_indices = @transform_2, window_bounds = array<i64: 16, 32>}, {transform_indices = @transform_3, window_bounds = array<i64: 1, 8, 128>}]} {
    %c0 = arith.constant 0 : index
    %c0_0 = arith.constant 0 : index
    %0 = vector.load %arg1[%c0, %c0_0] : memref<16x32xf32, #tpu.memory_space<vmem>>, vector<16x32xf32>
    %c0_1 = arith.constant 0 : index
    %c0_2 = arith.constant 0 : index
    %1 = vector.load %arg2[%c0_1, %c0_2] : memref<32x32xf32, #tpu.memory_space<vmem>>, vector<32x32xf32>
    %cst = arith.constant dense<0.000000e+00> : vector<16x32xf32>
    %2 = tpu.matmul %0, %1, %cst {dimension_numbers = #tpu.dot_dimension_numbers<[1], [0], [0], [1], [0, 0, 1, 1], [], []>} : vector<16x32xf32>, vector<32x32xf32>, vector<16x32xf32> -> vector<16x32xf32>
    %c0_3 = arith.constant 0 : index
    %c0_4 = arith.constant 0 : index
    %3 = vector.load %arg3[%c0_3, %c0_4] : memref<16x32xf32, #tpu.memory_space<vmem>>, vector<16x32xf32>
    %4 = arith.mulf %2, %3 : vector<16x32xf32>
    %cst_5 = arith.constant dense<0.000000e+00> : vector<16xf32>
    %5 = vector.multi_reduction <add>, %4, %cst_5 [1] : vector<16x32xf32> to vector<16xf32>
    %6 = vector.shape_cast %5 : vector<16xf32> to vector<16x1xf32>
    %cst_6 = arith.constant dense<0.000000e+00> : vector<1xf32>
    %7 = vector.multi_reduction <add>, %6, %cst_6 [0] : vector<16x1xf32> to vector<1xf32>
    %8 = vector.shape_cast %7 : vector<1xf32> to vector<1x1xf32>
    %9 = vector.shape_cast %8 : vector<1x1xf32> to vector<1x1x1xf32>
    %10 = vector.shape_cast %9 : vector<1x1x1xf32> to vector<1x1x1xf32>
    %11 = vector.broadcast %10 : vector<1x1x1xf32> to vector<1x8x128xf32>
    %c0_7 = arith.constant 0 : index
    %c0_8 = arith.constant 0 : index
    %c0_9 = arith.constant 0 : index
    %12 = vector.load %arg4[%c0_7, %c0_8, %c0_9] : memref<1x8x128xf32, #tpu.memory_space<vmem>>, vector<1x8x128xf32>
    tpu.vector_store %arg4[%c0_7, %c0_8, %c0_9], %11 {strides = array<i32>} : memref<1x8x128xf32, #tpu.memory_space<vmem>>, vector<1x8x128xf32>,
    return
  }
  func.func @transform_0(%arg0: i32) -> (i32, i32) {
    %c0_i32 = arith.constant 0 : i32
    %c0_i32_0 = arith.constant 0 : i32
    return %arg0, %c0_i32 : i32, i32
  }
  func.func @transform_1(%arg0: i32) -> (i32, i32) {
    %c0_i32 = arith.constant 0 : i32
    %c0_i32_0 = arith.constant 0 : i32
    %c0_i32_1 = arith.constant 0 : i32
    return %c0_i32, %c0_i32_0 : i32, i32
  }
  func.func @transform_2(%arg0: i32) -> (i32, i32) {
    %c0_i32 = arith.constant 0 : i32
    %c0_i32_0 = arith.constant 0 : i32
    return %arg0, %c0_i32 : i32, i32
  }
  func.func @transform_3(%arg0: i32) -> (i32, i32, i32) {
    %c0_i32 = arith.constant 0 : i32
    %c0_i32_0 = arith.constant 0 : i32
    %c0_i32_1 = arith.constant 0 : i32
    return %arg0, %c0_i32, %c0_i32_0 : i32, i32, i32
  }
}

</mosaic_0001>

<llo_original>
// kernel: tpu_custom_call.1
$region0: #{tpu_custom_call.1}
  #allocation0 [shape = 'u32[]', space=smem, size = 0x4, offset = 0x4, fixed_abs, tag = 'smem constant byte address 0x4 - core index']
  #allocation1 [shape = 'u32[72,128]{1,0:T(1,128)}', space=vmem, size = 0x9000, scoped, tag = 'internal scratch']
  %s0 = inlined_call_operand.hbm [shape: f32[16,32], index: 0, kind: input, shape index: {}]
  %s1 = inlined_call_operand.hbm [shape: f32[32,32], index: 1, kind: input, shape index: {}]
  %s2 = inlined_call_operand.hbm [shape: f32[16,32], index: 2, kind: input, shape index: {}]
  %s3 = inlined_call_operand.hbm [shape: f32[1,8,128], index: 3, kind: output, shape index: {}]
  %s4 = sld [smem:[#allocation0]]
  $region34: #{tpu_custom_call.1} parent=0
    _
  %s6 = ssub.s32 1, %s4
  %s7 = scalar_select 0, %s6, %s4
  $region1: #{tpu_custom_call.1} parent=0
    #allocation2 [shape = 'u8[8192]{0}', space=vmem, size = 0x2000, scoped, tag = 'input window, operand 0, single buffered']
    #allocation3 [shape = 's32[1]{0}', space=sflag, size = 0x4, scoped, tag = 'scoped memory for tpu_custom_call.1']
    #allocation4 [shape = 's32[1]{0}', space=sflag, size = 0x4, scoped, tag = 'scoped memory for tpu_custom_call.1']
    #allocation5 [shape = 'u8[16384]{0}', space=vmem, size = 0x4000, scoped, tag = 'input window, operand 1, single buffered']
    #allocation6 [shape = 's32[1]{0}', space=sflag, size = 0x4, scoped, tag = 'scoped memory for tpu_custom_call.1']
    #allocation7 [shape = 'u8[8192]{0}', space=vmem, size = 0x2000, scoped, tag = 'input window, operand 2, single buffered']
    #allocation8 [shape = 'u8[4096]{0}', space=vmem, size = 0x1000, scoped, tag = 'output window, operand 0, single buffered']
    %8 = vsyncpa [#allocation3], 0
    %9 = vsyncpa [#allocation6], 0
    %10 = vsyncpa [#allocation4], 0
    // Predicated region
    $region2: #{tpu_custom_call.1} parent=1 // pred_check
      _
    $region3: #{tpu_custom_call.1} parent=1 // pred_check_branch
      %12 = sbr.rel (0) target = $region5
    $region4: #{tpu_custom_call.1} parent=1 // pred_region
      %14 = vsyncadd [#allocation3], 0
      %s15 = sshll.u32 %s0, 4
      %s16 = int_to_ptr.hbm [resolvable:$true] %s15
      %s17 = sshll.u32 [#allocation2], 4
      %s18 = int_to_ptr.vmem [resolvable:$true] %s17
      %23 = dma.hbm_to_vmem [thread:$0]  %s16, 256, %s18, [#allocation3], 128, 128, 8
    $region5: #{tpu_custom_call.1} parent=1 // pred_fallthru
      _
    // Predicated region
    $region6: #{tpu_custom_call.1} parent=1 // pred_check
      _
    $region7: #{tpu_custom_call.1} parent=1 // pred_check_branch
      %25 = sbr.rel (0) target = $region9
    $region8: #{tpu_custom_call.1} parent=1 // pred_region
      %27 = vsyncadd [#allocation6], 0
      %s28 = sshll.u32 %s1, 4
      %s29 = int_to_ptr.hbm [resolvable:$true] %s28
      %s30 = sshll.u32 [#allocation5], 4
      %s31 = int_to_ptr.vmem [resolvable:$true] %s30
      %36 = dma.hbm_to_vmem [thread:$0]  %s29, 512, %s31, [#allocation6], 128, 128, 8
    $region9: #{tpu_custom_call.1} parent=1 // pred_fallthru
      _
    // Predicated region
    $region10: #{tpu_custom_call.1} parent=1 // pred_check
      _
    $region11: #{tpu_custom_call.1} parent=1 // pred_check_branch
      %38 = sbr.rel (0) target = $region13
    $region12: #{tpu_custom_call.1} parent=1 // pred_region
      %40 = vsyncadd [#allocation6], 0
      %s41 = sshll.u32 %s2, 4
      %s42 = int_to_ptr.hbm [resolvable:$true] %s41
      %s43 = sshll.u32 [#allocation7], 4
      %s44 = int_to_ptr.vmem [resolvable:$true] %s43
      %49 = dma.hbm_to_vmem [thread:$0]  %s42, 256, %s44, [#allocation6], 128, 128, 8
    $region13: #{tpu_custom_call.1} parent=1 // pred_fallthru
      _
    // Predicated region
    $region14: #{tpu_custom_call.1} parent=1 // pred_check
      _
    $region15: #{tpu_custom_call.1} parent=1 // pred_check_branch
      %51 = sbr.rel (0) target = $region17
    $region16: #{tpu_custom_call.1} parent=1 // pred_region
      %53 = dma.done [#allocation3], 256
    $region17: #{tpu_custom_call.1} parent=1 // pred_fallthru
      _
    // Predicated region
    $region18: #{tpu_custom_call.1} parent=1 // pred_check
      _
    $region19: #{tpu_custom_call.1} parent=1 // pred_check_branch
      %55 = sbr.rel (0) target = $region21
    $region20: #{tpu_custom_call.1} parent=1 // pred_region
      %57 = dma.done [#allocation6], 512
    $region21: #{tpu_custom_call.1} parent=1 // pred_fallthru
      _
    // Predicated region
    $region22: #{tpu_custom_call.1} parent=1 // pred_check
      _
    $region23: #{tpu_custom_call.1} parent=1 // pred_check_branch
      %59 = sbr.rel (0) target = $region25
    $region24: #{tpu_custom_call.1} parent=1 // pred_region
      %61 = dma.done [#allocation6], 256
    $region25: #{tpu_custom_call.1} parent=1 // pred_fallthru
      _
    %v62 = vld [vmem:[#allocation2] sm:$0xff]
    %v63 = vld [vmem:[#allocation2 + $0x8] sm:$0xff]
    %v64 = vld [vmem:[#allocation5] sm:$0xff]
    %v65 = vld [vmem:[#allocation5 + $0x8] sm:$0xff]
    %v66 = vld [vmem:[#allocation5 + $0x10] sm:$0xff]
    %v67 = vld [vmem:[#allocation5 + $0x18] sm:$0xff]
    %vm68 = vcmask 261120
    %v70 = vsel %vm68, %v62, 0
    %v73 = vsel %vm68, %v63, 0
    %75 = vmatpush.msra.mxu0 0.0
    %76 = vmatpush.msra.mxu0 0.0
    %77 = vmatpush.msra.mxu0 0.0
    %78 = vmatpush.msra.mxu0 0.0
    %79 = vmatpush.msra.mxu0 0.0
    %80 = vmatpush.msra.mxu0 0.0
    %81 = vmatpush.msra.mxu0 0.0
    %82 = vmatpush.msra.mxu0 0.0
    %83 = vmatpush.msra.mxu0 0.0
    %84 = vmatpush.msra.mxu0 0.0
    %85 = vmatpush.msra.mxu0 0.0
    %86 = vmatpush.msra.mxu0 0.0
    %87 = vmatpush.msra.mxu0 %v67
    %88 = vmatpush.msra.mxu0 %v66
    %89 = vmatpush.msra.mxu0 %v65
    %90 = vmatpush.msra.mxu0 %v64
    %91 = vmatmul.f32.gmra.mxu0 %v70
    %v92 = vpop.f32.mrf.mxu0
    %v93 = vadd.f32 0.0, %v92
    %94 = vmatmul.f32.gmra.mxu0 %v73
    %v95 = vpop.f32.mrf.mxu0
    %v96 = vadd.f32 0.0, %v95
    %97 = vdwg.mxu0
    %v98 = vld [vmem:[#allocation7] sm:$0xff]
    %v99 = vld [vmem:[#allocation7 + $0x8] sm:$0xff]
    %v100 = vmul.f32 %v93, %v98
    %v101 = vmul.f32 %v96, %v99
    %v102 = vsel %vm68, %v100, 0.0
    %103 = vadd.xlane.f32.xlu0 %v102
    %v104 = vpop.xlane.xlu0 %103
    %v105 = vsel %vm68, %v101, 0.0
    %106 = vadd.xlane.f32.xlu0 %v105
    %v107 = vpop.xlane.xlu0 %106
    %v108 = vadd.f32 %v104, %v107
    %v109 = vrot.slane %v108, 4
    %v110 = vadd.f32 %v108, %v109
    %v111 = vrot.slane %v110, 2
    %v112 = vadd.f32 %v110, %v111
    %v113 = vrot.slane %v112, 1
    %v114 = vadd.f32 %v112, %v113
    %115 = vst [vmem:[#allocation8] sm:$0xff] %v114
    // Predicated region
    $region26: #{tpu_custom_call.1} parent=1 // pred_check
      _
    $region27: #{tpu_custom_call.1} parent=1 // pred_check_branch
      %117 = sbr.rel (0) target = $region29
    $region28: #{tpu_custom_call.1} parent=1 // pred_region
      %119 = vsyncadd [#allocation4], 0
      %s121 = sshll.u32 [#allocation8], 4
      %s122 = int_to_ptr.vmem [resolvable:$true] %s121
      %s123 = sshll.u32 %s3, 4
      %s124 = int_to_ptr.hbm [resolvable:$true] %s123
      %126 = dma.vmem_to_hbm [thread:$0]  %s122, 128, %s124, [#allocation4]
    $region29: #{tpu_custom_call.1} parent=1 // pred_fallthru
      _
    // Predicated region
    $region30: #{tpu_custom_call.1} parent=1 // pred_check
      _
    $region31: #{tpu_custom_call.1} parent=1 // pred_check_branch
      %128 = sbr.rel (0) target = $region33
    $region32: #{tpu_custom_call.1} parent=1 // pred_region
      %130 = dma.done [#allocation4], 128
    $region33: #{tpu_custom_call.1} parent=1 // pred_fallthru
      _
    %131 = vsyncpa [#allocation3], 1
    %132 = vsyncpa [#allocation6], 1
    %133 = vsyncpa [#allocation4], 1

</llo_original>
